<compile_context>
chip_gen: v7x
topology: tpu7x:2x2x1
jax: 0.10.0
libtpu: 0.0.40
codegen_flags: <defaults>
</compile_context>

<pallas_src>
import functools

import numpy as np
import jax
import jax.numpy as jnp
from jax.experimental import pallas as pl
from jax.experimental.pallas import tpu as pltpu

BN_EPS = 1e-5            # PointBatchNorm eps (eval mode, running stats 0/1)
ROW_GRANULE = 16         # row padding granule (covers bf16 (16,128) packing)


def _detect_tpu_kind():
    try:
        return jax.devices()[0].device_kind.lower()
    except Exception:
        return ""


_KIND = _detect_tpu_kind()
if ("v5" in _KIND) or ("v6" in _KIND):
    # 128 MiB VMEM/TC: deeper tiles, bigger scoped-VMEM budget.
    TILE_LIN, TILE_GVA = 1024, 256
    _VMEM_LIMIT = 96 * 1024 * 1024
else:
    # v7x (64 MiB VMEM/TC) and unknown generations: conservative.
    TILE_LIN, TILE_GVA = 512, 128
    _VMEM_LIMIT = 48 * 1024 * 1024

_COMPILER_PARAMS = pltpu.CompilerParams(
    dimension_semantics=("parallel",),   # row grid shards across TCs on v7x
    vmem_limit_bytes=_VMEM_LIMIT,
)


# ----------------------------------------------------------------------------
# small helpers
# ----------------------------------------------------------------------------
def _round_up(n, m):
    return ((n + m - 1) // m) * m


def _row_plan(n, max_tile):
    """Pick (tile, n_pad) with n_pad % tile == 0 and tile a row granule multiple
    (or equal to the full row count)."""
    n_pad = _round_up(n, ROW_GRANULE)
    if n_pad > max_tile:
        n_pad = _round_up(n, max_tile)
        return max_tile, n_pad
    half = n_pad // 2
    # small stage: still expose >=2 grid steps when cheap (v7x megacore).
    if half >= ROW_GRANULE and half % ROW_GRANULE == 0:
        return half, n_pad
    return n_pad, n_pad


def _pad_to(x, n_pad, fill=0):
    n = x.shape[0]
    if n_pad == n:
        return x
    pad = jnp.full((n_pad - n,) + x.shape[1:], fill, x.dtype)
    return jnp.concatenate([x, pad], axis=0)


def offset2batch(offset, n):
    off = np.asarray(offset)
    batch = np.zeros(n, np.int32)
    prev = 0
    for i, o in enumerate(off):
        batch[prev:int(o)] = i
        prev = int(o)
    return jnp.asarray(batch)


# ----------------------------------------------------------------------------
# Pallas kernel 1: fused Linear + BN(eval) affine + optional residual + ReLU
# ----------------------------------------------------------------------------
def _linear_kernel(x_ref, w_ref, b_ref, s_ref, sh_ref, *rest, relu, has_res):
    if has_res:
        res_ref, o_ref = rest
    else:
        (o_ref,) = rest
    y = jnp.dot(x_ref[...].astype(jnp.bfloat16), w_ref[...],
                preferred_element_type=jnp.float32)
    y = y + b_ref[...]                  # bias            [1, Cout] broadcast
    y = y * s_ref[...] + sh_ref[...]    # BN eval affine  [1, Cout] broadcast
    if has_res:
        y = y + res_ref[...].astype(jnp.float32)
    if relu:
        y = jnp.maximum(y, 0.0)
    o_ref[...] = y.astype(o_ref.dtype)


def linear_fused(x, w, b=None, scale=None, shift=None, residual=None, relu=False,
                 out_dtype=jnp.bfloat16):
    n, cin = x.shape
    cout = w.shape[1]
    w = w.astype(jnp.bfloat16)          # pre-cast weight (constant block stays bf16)
    if b is None:
        b = jnp.zeros((cout,), jnp.float32)
    if scale is None:
        scale = jnp.ones((cout,), jnp.float32)
    if shift is None:
        shift = jnp.zeros((cout,), jnp.float32)

    tile, n_pad = _row_plan(n, TILE_LIN)
    xp = _pad_to(x, n_pad)
    inputs = [xp, w, b.reshape(1, cout), scale.reshape(1, cout), shift.reshape(1, cout)]
    in_specs = [
        pl.BlockSpec((tile, cin), lambda i: (i, 0)),
        pl.BlockSpec((cin, cout), lambda i: (0, 0)),
        pl.BlockSpec((1, cout), lambda i: (0, 0)),
        pl.BlockSpec((1, cout), lambda i: (0, 0)),
        pl.BlockSpec((1, cout), lambda i: (0, 0)),
    ]
    has_res = residual is not None
    if has_res:
        inputs.append(_pad_to(residual, n_pad))
        in_specs.append(pl.BlockSpec((tile, cout), lambda i: (i, 0)))

    out = pl.pallas_call(
        functools.partial(_linear_kernel, relu=relu, has_res=has_res),
        out_shape=jax.ShapeDtypeStruct((n_pad, cout), out_dtype),
        grid=(n_pad // tile,),
        in_specs=in_specs,
        out_specs=pl.BlockSpec((tile, cout), lambda i: (i, 0)),
        compiler_params=_COMPILER_PARAMS,
    )(*inputs)
    return out[:n]


# ----------------------------------------------------------------------------
# Pallas kernel 2: fused Block.fc1 + norm1 + ReLU + q|k|v projection
# ----------------------------------------------------------------------------
def _qkv_kernel(x_ref, w1_ref, s1_ref, sh1_ref,
                wqkv_ref, bqkv_ref, sqkv_ref, shqkv_ref, slope_ref, o_ref):
    h = jnp.dot(x_ref[...].astype(jnp.bfloat16), w1_ref[...],
                preferred_element_type=jnp.float32)
    h = jnp.maximum(h * s1_ref[...] + sh1_ref[...], 0.0)          # fc1 -> norm1 -> ReLU
    y = jnp.dot(h.astype(jnp.bfloat16), wqkv_ref[...],
                preferred_element_type=jnp.float32) + bqkv_ref[...]
    y = y * sqkv_ref[...] + shqkv_ref[...]                        # BN for q,k ; identity for v
    y = jnp.maximum(y, y * slope_ref[...])                        # ReLU q,k (slope 0); id v (slope 1)
    o_ref[...] = y.astype(o_ref.dtype)


def qkv_fused(x, fc1_w, n1_scale, n1_shift, a):
    n, c = x.shape
    c3 = 3 * c
    tile, n_pad = _row_plan(n, TILE_LIN)
    xp = _pad_to(x, n_pad)
    out = pl.pallas_call(
        _qkv_kernel,
        out_shape=jax.ShapeDtypeStruct((n_pad, c3), jnp.bfloat16),
        grid=(n_pad // tile,),
        in_specs=[
            pl.BlockSpec((tile, c), lambda i: (i, 0)),
            pl.BlockSpec((c, c), lambda i: (0, 0)),
            pl.BlockSpec((1, c), lambda i: (0, 0)),
            pl.BlockSpec((1, c), lambda i: (0, 0)),
            pl.BlockSpec((c, c3), lambda i: (0, 0)),
            pl.BlockSpec((1, c3), lambda i: (0, 0)),
            pl.BlockSpec((1, c3), lambda i: (0, 0)),
            pl.BlockSpec((1, c3), lambda i: (0, 0)),
            pl.BlockSpec((1, c3), lambda i: (0, 0)),
        ],
        out_specs=pl.BlockSpec((tile, c3), lambda i: (i, 0)),
        compiler_params=_COMPILER_PARAMS,
    )(xp, fc1_w.astype(jnp.bfloat16), n1_scale.reshape(1, c), n1_shift.reshape(1, c),
      a["wqkv"], a["bqkv"], a["sqkv"], a["shqkv"], a["slope"])
    return out[:n, :c], out[:n, c:2 * c], out[:n, 2 * c:]


# ----------------------------------------------------------------------------
# Pallas kernel 3: GroupedVectorAttention core (+ fused Block.norm2 + ReLU)
# ----------------------------------------------------------------------------
def _gva_kernel(q_ref, kg_ref, vg_ref, pos_ref, mask_ref,
                wp1_ref, bp1_ref, p1s_ref, p1sh_ref, wp2_ref, bp2_ref,
                ww1_ref, bw1_ref, w1s_ref, w1sh_ref, ww2_ref, bw2_ref,
                expand_ref, n2s_ref, n2sh_ref, o_ref, *, groups):
    tn, k, c = kg_ref.shape
    g = groups

    q = q_ref[...].astype(jnp.float32)
    kg = kg_ref[...].astype(jnp.float32)
    vg = vg_ref[...].astype(jnp.float32)
    mask = mask_ref[...]                    # [tn, k]

    # linear_p_bias: Linear(3,3)+BN+ReLU then Linear(3,C); flat rows, MXU dots (f32, tiny K).
    pos2 = pos_ref[...].reshape(tn * k, 3)
    h = jnp.dot(pos2, wp1_ref[...], preferred_element_type=jnp.float32) + bp1_ref[...]
    h = jnp.maximum(h * p1s_ref[...] + p1sh_ref[...], 0.0)
    pe = (jnp.dot(h, wp2_ref[...], preferred_element_type=jnp.float32)
          + bp2_ref[...]).reshape(tn, k, c)                       # [tn, k, c]

    rel = kg - q[:, None, :] + pe           # relation_qk (pe_bias path)
    val = vg + pe                           # value + pe_bias

    # weight_encoding: Linear(C,G)+BN+ReLU+Linear(G,G); bf16 MXU dots on flat rows.
    rel2 = rel.reshape(tn * k, c).astype(jnp.bfloat16)
    w1 = jnp.dot(rel2, ww1_ref[...], preferred_element_type=jnp.float32) + bw1_ref[...]
    w1 = jnp.maximum(w1 * w1s_ref[...] + w1sh_ref[...], 0.0)
    w2 = jnp.dot(w1.astype(jnp.bfloat16), ww2_ref[...],
                 preferred_element_type=jnp.float32) + bw2_ref[...]
    wgt = w2.reshape(tn, k, g)

    # softmax over neighbours (dim=1), then validity mask (pointcept order)
    wmax = jnp.max(wgt, axis=1, keepdims=True)
    wexp = jnp.exp(wgt - wmax)
    inv = pl.reciprocal(jnp.sum(wexp, axis=1, keepdims=True), approx=True)
    attn = wexp * inv * mask[:, :, None]

    # grouped aggregation (einsum "n s g i, n s g -> n g i"): expand per-group
    # weights to full channel width with a 0/1 expansion matmul (bf16 MXU),
    # then one VPU multiply + one XLU reduction over the neighbour axis.
    attn_full = jnp.dot(attn.reshape(tn * k, g).astype(jnp.bfloat16), expand_ref[...],
                        preferred_element_type=jnp.float32).reshape(tn, k, c)
    out = jnp.sum(attn_full * val, axis=1)            # [tn, c]

    # fused Block.norm2 + ReLU
    o_ref[...] = jnp.maximum(out * n2s_ref[...] + n2sh_ref[...], 0.0).astype(o_ref.dtype)


def gva_attention(q, kg, vg, pos, mask, a, groups):
    n, k, c = kg.shape
    g = groups
    tile, n_pad = _row_plan(n, TILE_GVA)
    qp, kgp, vgp = _pad_to(q, n_pad), _pad_to(kg, n_pad), _pad_to(vg, n_pad)
    posp, maskp = _pad_to(pos, n_pad), _pad_to(mask, n_pad)

    def r2(x):
        return x.reshape(1, -1)

    def full2(shape):
        return pl.BlockSpec(shape, lambda i: (0, 0))

    inputs = [qp, kgp, vgp, posp, maskp,
              a["wp1"], r2(a["bp1"]), r2(a["p1_scale"]), r2(a["p1_shift"]),
              a["wp2"], r2(a["bp2"]),
              a["ww1"], r2(a["bw1"]), r2(a["w1_scale"]), r2(a["w1_shift"]),
              a["ww2"], r2(a["bw2"]),
              a["expand"], r2(a["n2_scale"]), r2(a["n2_shift"])]
    in_specs = [
        pl.BlockSpec((tile, c), lambda i: (i, 0)),
        pl.BlockSpec((tile, k, c), lambda i: (i, 0, 0)),
        pl.BlockSpec((tile, k, c), lambda i: (i, 0, 0)),
        pl.BlockSpec((tile, k, 3), lambda i: (i, 0, 0)),
        pl.BlockSpec((tile, k), lambda i: (i, 0)),
        full2((3, 3)), full2((1, 3)), full2((1, 3)), full2((1, 3)),
        full2((3, c)), full2((1, c)),
        full2((c, g)), full2((1, g)), full2((1, g)), full2((1, g)),
        full2((g, g)), full2((1, g)),
        full2((g, c)), full2((1, c)), full2((1, c)),
    ]
    out = pl.pallas_call(
        functools.partial(_gva_kernel, groups=groups),
        out_shape=jax.ShapeDtypeStruct((n_pad, c), jnp.bfloat16),
        grid=(n_pad // tile,),
        in_specs=in_specs,
        out_specs=pl.BlockSpec((tile, c), lambda i: (i, 0)),
        compiler_params=_COMPILER_PARAMS,
    )(*inputs)
    return out[:n]


# ----------------------------------------------------------------------------
# glue: KNN, grouping, voxel-grid pooling, unpooling
# ----------------------------------------------------------------------------
@functools.partial(jax.jit, static_argnames=("k",))
def knn_query(coord, batch, *, k):
    # brute-force KNN restricted to the same point cloud; invalid slots -> -1
    # TODO(synk): pointops.knn_query is a data-dependent search; at real point
    # counts this O(N^2) distance + top_k should be tiled / spatially hashed.
    d2 = jnp.sum((coord[:, None, :] - coord[None, :, :]) ** 2, axis=-1)
    same = batch[:, None] == batch[None, :]
    d2 = jnp.where(same, d2, jnp.inf)
    neg, idx = jax.lax.top_k(-d2, k)
    valid = jnp.isfinite(neg)
    return jnp.where(valid, idx.astype(jnp.int32), -1)


def grid_pool(p, coord, feat, offset, grid_size):
    n = coord.shape[0]
    batch = offset2batch(offset, n)
    h = linear_fused(feat, p["w"], None, p["scale"], p["shift"], relu=True)

    # TODO(synk): host-numpy voxel clustering forces a device->host sync per
    # encoder stage (torch_cluster.voxel_grid equivalent); keep off jit path.
    coord_np = np.asarray(coord)
    batch_np = np.asarray(batch)
    nb = int(batch_np.max()) + 1
    start = np.stack([coord_np[batch_np == b].min(axis=0) for b in range(nb)])
    vox = np.floor((coord_np - start[batch_np]) / grid_size).astype(np.int64)
    keys = np.concatenate([batch_np[:, None].astype(np.int64), vox], axis=1)
    uniq, cluster = np.unique(keys, axis=0, return_inverse=True)
    m = uniq.shape[0]
    cluster_j = jnp.asarray(cluster.astype(np.int32))
    counts = jnp.asarray(np.bincount(cluster, minlength=m).astype(np.float32))

    coord_pool = jax.ops.segment_sum(coord, cluster_j, num_segments=m) / counts[:, None]
    feat_pool = jax.ops.segment_max(h, cluster_j, num_segments=m)
    batch_pool = uniq[:, 0]
    new_offset = np.cumsum(np.bincount(batch_pool, minlength=nb)).astype(np.int64)
    return coord_pool, feat_pool, new_offset, cluster_j


@jax.jit
def unpool_with_skip(p, feat, skip_feat, cluster):
    a = linear_fused(feat, p["w"], p["b"], p["scale"], p["shift"], relu=True)
    b = linear_fused(skip_feat, p["w_skip"], p["b_skip"], p["scale_skip"], p["shift_skip"], relu=True)
    return jnp.take(a, cluster, axis=0) + b   # backend="map"


# ----------------------------------------------------------------------------
# block / stage forward
# ----------------------------------------------------------------------------
def block_forward(p, coord, feat, ref_idx, groups):
    identity = feat
    a = p["attn"]
    # fused fc1 -> norm1 -> ReLU -> concatenated q|k|v projection (one HBM read
    # of feat, one lane-dense [N, 3C] matmul output, single pipeline ramp-up).
    q, k, v = qkv_fused(feat, p["fc1"], p["n1_scale"], p["n1_shift"], a)
    # TODO(synk): gather K/V inside the GVA kernel (scalar-prefetch ref_idx +
    # manual DMA) to avoid materializing [N,K,C] in HBM at real point counts
    # (bf16 q/k/v already halves the gather traffic).
    gidx = jnp.maximum(ref_idx, 0)
    mask = (ref_idx >= 0).astype(jnp.float32)
    kg = jnp.take(k, gidx, axis=0)                       # [N, K, C] bf16
    vg = jnp.take(v, gidx, axis=0)
    pos = jnp.take(coord, gidx, axis=0) - coord[:, None, :]
    attn_out = gva_attention(q, kg, vg, pos, mask, a, groups)   # norm2+ReLU fused
    # norm3(fc3(.)) + residual, then ReLU  -> fused in linear kernel
    return linear_fused(attn_out, p["fc3"], None, p["n3_scale"], p["n3_shift"],
                        residual=identity, relu=True)


@functools.partial(jax.jit, static_argnames=("groups",))
def run_blocks(blocks, coord, feat, ref_idx, *, groups):
    for blk in blocks:
        feat = block_forward(blk, coord, feat, ref_idx, groups)
    return feat


def run_stage(blocks, coord, feat, offset, groups, k_nbr):
    """KNN once per stage, pad the point dim once, run all blocks under one jit."""
    n = coord.shape[0]
    if not blocks:
        return feat
    batch = offset2batch(offset, n)
    ref_idx = knn_query(coord, batch, k=min(k_nbr, n))
    _, n_pad = _row_plan(n, TILE_LIN)
    feat_p = run_blocks(blocks,
                        _pad_to(coord, n_pad),
                        _pad_to(feat, n_pad),
                        _pad_to(ref_idx, n_pad, fill=-1),
                        groups=groups)
    return feat_p[:n]


@jax.jit
def seg_head(hd, feat):
    h = linear_fused(feat, hd["w1"], hd["b1"], hd["scale"], hd["shift"], relu=True)
    return linear_fused(h, hd["w2"], hd["b2"], None, None, relu=False,
                        out_dtype=jnp.float32)


# ----------------------------------------------------------------------------
# parameter init (deterministic, synthetic; BN uses eval running stats 0/1)
# ----------------------------------------------------------------------------
def _init_linear(key, cin, cout, bias=True):
    kw, kb = jax.random.split(key)
    w = jax.random.normal(kw, (cin, cout), jnp.float32) * (1.0 / np.sqrt(cin))
    b = (jax.random.normal(kb, (cout,), jnp.float32) * 0.02 if bias
         else jnp.zeros((cout,), jnp.float32))
    return w, b


def _init_bn(key, c):
    kg, kb = jax.random.split(key)
    gamma = 1.0 + 0.05 * jax.random.normal(kg, (c,), jnp.float32)
    beta = 0.05 * jax.random.normal(kb, (c,), jnp.float32)
    scale = gamma / jnp.sqrt(1.0 + BN_EPS)    # running_var = 1
    shift = beta                               # running_mean = 0
    return scale, shift


def _init_gva(key, c, g):
    ks = jax.random.split(key, 11)
    wq, bq = _init_linear(ks[0], c, c)
    qs, qsh = _init_bn(ks[1], c)
    wk, bk = _init_linear(ks[2], c, c)
    kss, ksh = _init_bn(ks[3], c)
    wv, bv = _init_linear(ks[4], c, c)
    wp1, bp1 = _init_linear(ks[5], 3, 3)
    p1s, p1sh = _init_bn(ks[6], 3)
    wp2, bp2 = _init_linear(ks[7], 3, c)
    ww1, bw1 = _init_linear(ks[8], c, g)
    w1s, w1sh = _init_bn(ks[9], g)
    ww2, bw2 = _init_linear(ks[10], g, g)

    ones = jnp.ones((c,), jnp.float32)
    zeros = jnp.zeros((c,), jnp.float32)
    # hoisted: pre-concatenated + pre-cast fused q|k|v projection constants
    wqkv = jnp.concatenate([wq, wk, wv], axis=1).astype(jnp.bfloat16)      # [C, 3C]
    bqkv = jnp.concatenate([bq, bk, bv]).reshape(1, 3 * c)
    sqkv = jnp.concatenate([qs, kss, ones]).reshape(1, 3 * c)
    shqkv = jnp.concatenate([qsh, ksh, zeros]).reshape(1, 3 * c)
    slope = jnp.concatenate([zeros, zeros, ones]).reshape(1, 3 * c)
    # hoisted: 0/1 group-expansion matrix  expand[gi, ch] = (ch // (c//g) == gi)
    cg = c // g
    expand = jnp.asarray(np.kron(np.eye(g, dtype=np.float32),
                                 np.ones((1, cg), np.float32))).astype(jnp.bfloat16)
    return dict(wqkv=wqkv, bqkv=bqkv, sqkv=sqkv, shqkv=shqkv, slope=slope,
                wp1=wp1, bp1=bp1, p1_scale=p1s, p1_shift=p1sh,
                wp2=wp2, bp2=bp2,
                ww1=ww1.astype(jnp.bfloat16), bw1=bw1,
                w1_scale=w1s, w1_shift=w1sh,
                ww2=ww2.astype(jnp.bfloat16), bw2=bw2,
                expand=expand)


def _init_block(key, c, g):
    ks = jax.random.split(key, 6)
    attn = _init_gva(ks[0], c, g)
    fc1, _ = _init_linear(ks[1], c, c, bias=False)
    fc3, _ = _init_linear(ks[2], c, c, bias=False)
    n1s, n1sh = _init_bn(ks[3], c)
    n2s, n2sh = _init_bn(ks[4], c)
    n3s, n3sh = _init_bn(ks[5], c)
    attn["n2_scale"], attn["n2_shift"] = n2s, n2sh   # fused into GVA kernel
    return dict(attn=attn, fc1=fc1.astype(jnp.bfloat16), fc3=fc3,
                n1_scale=n1s, n1_shift=n1sh, n3_scale=n3s, n3_shift=n3sh)


CFG = dict(
    in_channels=4,
    num_classes=2,
    patch_embed_channels=32, patch_embed_groups=8, patch_embed_depth=1,
    enc_channels=(64, 128), enc_groups=(8, 16), enc_depths=(1, 1),
    dec_channels=(32, 64), dec_groups=(4, 8), dec_depths=(1, 1),
    grid_sizes=(0.6, 1.2),
    neighbours=8,
)


def init_model(key, cfg):
    keys = iter(jax.random.split(key, 128))

    def nk():
        return next(keys)

    params = {}
    c0 = cfg["patch_embed_channels"]
    w, _ = _init_linear(nk(), cfg["in_channels"], c0, bias=False)
    s, sh = _init_bn(nk(), c0)
    params["patch_proj"] = dict(w=w, scale=s, shift=sh)
    params["patch_blocks"] = [_init_block(nk(), c0, cfg["patch_embed_groups"])
                              for _ in range(cfg["patch_embed_depth"])]

    enc, in_c = [], c0
    for c, g, d in zip(cfg["enc_channels"], cfg["enc_groups"], cfg["enc_depths"]):
        w, _ = _init_linear(nk(), in_c, c, bias=False)
        s, sh = _init_bn(nk(), c)
        enc.append(dict(pool=dict(w=w, scale=s, shift=sh),
                        blocks=[_init_block(nk(), c, g) for _ in range(d)]))
        in_c = c
    params["enc"] = enc

    dec, S = [], len(cfg["enc_channels"])
    for i in range(S):
        c, g, d = cfg["dec_channels"][i], cfg["dec_groups"][i], cfg["dec_depths"][i]
        in_ch = cfg["enc_channels"][i] if i == S - 1 else cfg["dec_channels"][i + 1]
        skip_ch = cfg["enc_channels"][i - 1] if i > 0 else c0
        wu, bu = _init_linear(nk(), in_ch, c)
        su, shu = _init_bn(nk(), c)
        ws, bs = _init_linear(nk(), skip_ch, c)
        ss, shs = _init_bn(nk(), c)
        dec.append(dict(up=dict(w=wu, b=bu, scale=su, shift=shu,
                                w_skip=ws, b_skip=bs, scale_skip=ss, shift_skip=shs),
                        blocks=[_init_block(nk(), c, g) for _ in range(d)]))
    params["dec"] = dec

    cd0 = cfg["dec_channels"][0]
    w1, b1 = _init_linear(nk(), cd0, cd0)
    s1, sh1 = _init_bn(nk(), cd0)
    w2, b2 = _init_linear(nk(), cd0, cfg["num_classes"])
    params["head"] = dict(w1=w1, b1=b1, scale=s1, shift=sh1, w2=w2, b2=b2)
    return params


# ----------------------------------------------------------------------------
# forward pass (mirrors pointcept PTv2m1 forward, wrapper returns [:, 1])
# ----------------------------------------------------------------------------
def point_transformer_v2_forward(params, cfg, coord, feat, offset):
    k_nbr = cfg["neighbours"]

    # ---- GVAPatchEmbed
    pp = params["patch_proj"]
    feat = linear_fused(feat, pp["w"], None, pp["scale"], pp["shift"], relu=True)
    feat = run_stage(params["patch_blocks"], coord, feat, offset,
                     cfg["patch_embed_groups"], k_nbr)

    skip_list = [(coord, feat, offset)]
    cluster_list = []
    cur_coord, cur_feat, cur_offset = coord, feat, offset
    S = len(cfg["enc_channels"])

    # ---- Encoder stages (GridPool + GVA blocks)
    for i in range(S):
        pc, pf, po, cluster = grid_pool(params["enc"][i]["pool"],
                                        cur_coord, cur_feat, cur_offset,
                                        cfg["grid_sizes"][i])
        cluster_list.append(cluster)
        pf = run_stage(params["enc"][i]["blocks"], pc, pf, po,
                       cfg["enc_groups"][i], k_nbr)
        cur_coord, cur_feat, cur_offset = pc, pf, po
        if i < S - 1:
            skip_list.append((pc, pf, po))

    # ---- Decoder stages (UnpoolWithSkip + GVA blocks)
    for i in reversed(range(S)):
        skip_coord, skip_feat, skip_offset = skip_list[i]
        cur_feat = unpool_with_skip(params["dec"][i]["up"], cur_feat, skip_feat,
                                    cluster_list[i])
        cur_coord, cur_offset = skip_coord, skip_offset
        cur_feat = run_stage(params["dec"][i]["blocks"], cur_coord, cur_feat,
                             cur_offset, cfg["dec_groups"][i], k_nbr)

    # ---- seg head, then wrapper semantics: return logits[:, 1]
    logits = seg_head(params["head"], cur_feat)
    return logits[:, 1]


# ----------------------------------------------------------------------------
if __name__ == "__main__":
    key = jax.random.PRNGKey(0)
    kp, kc, kf = jax.random.split(key, 3)

    N1, N2 = 48, 32
    N = N1 + N2
    coord = jax.random.uniform(kc, (N, 3), jnp.float32) * 2.0
    feat = jax.random.normal(kf, (N, CFG["in_channels"]), jnp.float32)
    offset = jnp.array([N1, N], dtype=jnp.int32)   # torch-style cumulative offsets

    params = init_model(kp, CFG)
    out = point_transformer_v2_forward(params, CFG, coord, feat, offset)
    out = jax.block_until_ready(out)

    assert out.shape == (N,), out.shape
    assert bool(jnp.all(jnp.isfinite(out)))
    print("KERNEL_OK")
</pallas_src>

<mosaic_0001>
module attributes {stable_mosaic.version = 11 : i64} {
  func.func @_linear_kernel(%arg0: i32, %arg1: memref<80x4xf32, #tpu.memory_space<vmem>>, %arg2: memref<4x32xbf16, #tpu.memory_space<vmem>>, %arg3: memref<1x32xf32, #tpu.memory_space<vmem>>, %arg4: memref<1x32xf32, #tpu.memory_space<vmem>>, %arg5: memref<1x32xf32, #tpu.memory_space<vmem>>, %arg6: memref<80x32xbf16, #tpu.memory_space<vmem>>) attributes {dimension_semantics = [#tpu.dimension_semantics<parallel>], iteration_bounds = array<i64: 1>, scalar_prefetch = 0 : i64, scratch_operands = 0 : i64, tpu.core_type = #tpu.core_type<tc>, window_params = [{transform_indices = @transform_0, window_bounds = array<i64: 80, 4>}, {pipeline_mode = #tpu.pipeline_mode<synchronous>, transform_indices = @transform_1, window_bounds = array<i64: 4, 32>}, {pipeline_mode = #tpu.pipeline_mode<synchronous>, transform_indices = @transform_2, window_bounds = array<i64: 1, 32>}, {pipeline_mode = #tpu.pipeline_mode<synchronous>, transform_indices = @transform_3, window_bounds = array<i64: 1, 32>}, {pipeline_mode = #tpu.pipeline_mode<synchronous>, transform_indices = @transform_4, window_bounds = array<i64: 1, 32>}, {transform_indices = @transform_5, window_bounds = array<i64: 80, 32>}]} {
    %c0 = arith.constant 0 : index
    %c0_0 = arith.constant 0 : index
    %0 = vector.load %arg1[%c0, %c0_0] : memref<80x4xf32, #tpu.memory_space<vmem>>, vector<80x4xf32>
    %1 = arith.truncf %0 : vector<80x4xf32> to vector<80x4xbf16>
    %c0_1 = arith.constant 0 : index
    %c0_2 = arith.constant 0 : index
    %2 = vector.load %arg2[%c0_1, %c0_2] : memref<4x32xbf16, #tpu.memory_space<vmem>>, vector<4x32xbf16>
    %cst = arith.constant dense<0.000000e+00> : vector<80x32xf32>
    %3 = tpu.matmul %1, %2, %cst {dimension_numbers = #tpu.dot_dimension_numbers<[1], [0], [0], [1], [0, 0, 1, 1], [], []>} : vector<80x4xbf16>, vector<4x32xbf16>, vector<80x32xf32> -> vector<80x32xf32>
    %c0_3 = arith.constant 0 : index
    %c0_4 = arith.constant 0 : index
    %4 = vector.load %arg3[%c0_3, %c0_4] : memref<1x32xf32, #tpu.memory_space<vmem>>, vector<1x32xf32>
    %5 = vector.broadcast %4 : vector<1x32xf32> to vector<80x32xf32>
    %6 = arith.addf %3, %5 : vector<80x32xf32>
    %c0_5 = arith.constant 0 : index
    %c0_6 = arith.constant 0 : index
    %7 = vector.load %arg4[%c0_5, %c0_6] : memref<1x32xf32, #tpu.memory_space<vmem>>, vector<1x32xf32>
    %8 = vector.broadcast %7 : vector<1x32xf32> to vector<80x32xf32>
    %9 = arith.mulf %6, %8 : vector<80x32xf32>
    %c0_7 = arith.constant 0 : index
    %c0_8 = arith.constant 0 : index
    %10 = vector.load %arg5[%c0_7, %c0_8] : memref<1x32xf32, #tpu.memory_space<vmem>>, vector<1x32xf32>
    %11 = vector.broadcast %10 : vector<1x32xf32> to vector<80x32xf32>
    %12 = arith.addf %9, %11 : vector<80x32xf32>
    %cst_9 = arith.constant 0.000000e+00 : f32
    %13 = vector.broadcast %cst_9 : f32 to vector<80x32xf32>
    %14 = arith.maximumf %12, %13 : vector<80x32xf32>
    %15 = arith.truncf %14 : vector<80x32xf32> to vector<80x32xbf16>
    %c0_10 = arith.constant 0 : index
    %c0_11 = arith.constant 0 : index
    %16 = vector.load %arg6[%c0_10, %c0_11] : memref<80x32xbf16, #tpu.memory_space<vmem>>, vector<80x32xbf16>
    tpu.vector_store %arg6[%c0_10, %c0_11], %15 {strides = array<i32>} : memref<80x32xbf16, #tpu.memory_space<vmem>>, vector<80x32xbf16>,
    return
  }
  func.func @transform_0(%arg0: i32) -> (i32, i32) {
    %c0_i32 = arith.constant 0 : i32
    %c0_i32_0 = arith.constant 0 : i32
    return %arg0, %c0_i32 : i32, i32
  }
  func.func @transform_1(%arg0: i32) -> (i32, i32) {
    %c0_i32 = arith.constant 0 : i32
    %c0_i32_0 = arith.constant 0 : i32
    %c0_i32_1 = arith.constant 0 : i32
    return %c0_i32, %c0_i32_0 : i32, i32
  }
  func.func @transform_2(%arg0: i32) -> (i32, i32) {
    %c0_i32 = arith.constant 0 : i32
    %c0_i32_0 = arith.constant 0 : i32
    %c0_i32_1 = arith.constant 0 : i32
    return %c0_i32, %c0_i32_0 : i32, i32
  }
  func.func @transform_3(%arg0: i32) -> (i32, i32) {
    %c0_i32 = arith.constant 0 : i32
    %c0_i32_0 = arith.constant 0 : i32
    %c0_i32_1 = arith.constant 0 : i32
    return %c0_i32, %c0_i32_0 : i32, i32
  }
  func.func @transform_4(%arg0: i32) -> (i32, i32) {
    %c0_i32 = arith.constant 0 : i32
    %c0_i32_0 = arith.constant 0 : i32
    %c0_i32_1 = arith.constant 0 : i32
    return %c0_i32, %c0_i32_0 : i32, i32
  }
  func.func @transform_5(%arg0: i32) -> (i32, i32) {
    %c0_i32 = arith.constant 0 : i32
    %c0_i32_0 = arith.constant 0 : i32
    return %arg0, %c0_i32 : i32, i32
  }
}

</mosaic_0001>

<llo_original>
// kernel: tpu_custom_call.1
$region0: #{tpu_custom_call.1}
  #allocation0 [shape = 'u32[]', space=smem, size = 0x4, offset = 0x4, fixed_abs, tag = 'smem constant byte address 0x4 - core index']
  #allocation1 [shape = 'u32[144,128]{1,0:T(1,128)}', space=vmem, size = 0x12000, scoped, tag = 'internal scratch']
  %s0 = inlined_call_operand.vmem [shape: f32[80,4], index: 0, kind: input, shape index: {}]
  %s1 = inlined_call_operand.vmem [shape: bf16[4,32], index: 1, kind: input, shape index: {}]
  %s2 = inlined_call_operand.vmem [shape: f32[1,32], index: 2, kind: input, shape index: {}]
  %s3 = inlined_call_operand.vmem [shape: f32[1,32], index: 3, kind: input, shape index: {}]
  %s4 = inlined_call_operand.vmem [shape: f32[1,32], index: 4, kind: input, shape index: {}]
  %s5 = inlined_call_operand.vmem [shape: bf16[80,32], index: 5, kind: output, shape index: {}]
  %s6 = sld [smem:[#allocation0]]
  $region30: #{tpu_custom_call.1} parent=0
    _
  %s8 = ssub.s32 1, %s6
  %s9 = scalar_select 0, %s8, %s6
  // Predicated region
  $region2: #{tpu_custom_call.1} parent=0 // pred_check
    _
  $region3: #{tpu_custom_call.1} parent=0 // pred_check_branch
    %11 = sbr.rel (0) target = $region5
  $region4: #{tpu_custom_call.1} parent=0 // pred_region
    _
  $region5: #{tpu_custom_call.1} parent=0 // pred_fallthru
    _
  // Predicated region
  $region6: #{tpu_custom_call.1} parent=0 // pred_check
    _
  $region7: #{tpu_custom_call.1} parent=0 // pred_check_branch
    %13 = sbr.rel (0) target = $region9
  $region8: #{tpu_custom_call.1} parent=0 // pred_region
    _
  $region9: #{tpu_custom_call.1} parent=0 // pred_fallthru
    _
  // Predicated region
  $region10: #{tpu_custom_call.1} parent=0 // pred_check
    _
  $region11: #{tpu_custom_call.1} parent=0 // pred_check_branch
    %15 = sbr.rel (0) target = $region13
  $region12: #{tpu_custom_call.1} parent=0 // pred_region
    _
  $region13: #{tpu_custom_call.1} parent=0 // pred_fallthru
    _
  // Predicated region
  $region14: #{tpu_custom_call.1} parent=0 // pred_check
    _
  $region15: #{tpu_custom_call.1} parent=0 // pred_check_branch
    %17 = sbr.rel (0) target = $region17
  $region16: #{tpu_custom_call.1} parent=0 // pred_region
    _
  $region17: #{tpu_custom_call.1} parent=0 // pred_fallthru
    _
  // Predicated region
  $region18: #{tpu_custom_call.1} parent=0 // pred_check
    _
  $region19: #{tpu_custom_call.1} parent=0 // pred_check_branch
    %19 = sbr.rel (0) target = $region21
  $region20: #{tpu_custom_call.1} parent=0 // pred_region
    _
  $region21: #{tpu_custom_call.1} parent=0 // pred_fallthru
    _
  %v21 = vld [vmem:[%s0] sm:$0xff]
  %v22 = vld [vmem:[%s0 + $0x8] sm:$0xff]
  %v23 = vld [vmem:[%s0 + $0x10] sm:$0xff]
  %v24 = vld [vmem:[%s0 + $0x18] sm:$0xff]
  %v25 = vld [vmem:[%s0 + $0x20] sm:$0xff]
  %v26 = vld [vmem:[%s0 + $0x28] sm:$0xff]
  %v27 = vld [vmem:[%s0 + $0x30] sm:$0xff]
  %v28 = vld [vmem:[%s0 + $0x38] sm:$0xff]
  %v29 = vld [vmem:[%s0 + $0x40] sm:$0xff]
  %v30 = vld [vmem:[%s0 + $0x48] sm:$0xff]
  %v31 = vpack.c.bf16 %v22, %v21
  %v32 = vpack.c.bf16 %v24, %v23
  %v33 = vpack.c.bf16 %v26, %v25
  %v34 = vpack.c.bf16 %v28, %v27
  %v35 = vpack.c.bf16 %v30, %v29
  %v36 = vld [vmem:[%s1] sm:$0x3]
  %v37 = vld [vmem:[%s2] sm:$0x1]
  %v39 = vlaneseq
  %v40 = vshrl.u32 %v39, 7
  %v41 = vsub.s32 0, %v40
  %v42 = vrot.slane %v37, %v41
  %vm44 = vcmask 31744
  %v46 = vsel %vm44, %v31, 0
  %v49 = vsel %vm44, %v32, 0
  %v52 = vsel %vm44, %v33, 0
  %v55 = vsel %vm44, %v34, 0
  %v58 = vsel %vm44, %v35, 0
  %vm60 = vcmask 1041408
  %v62 = vsel %vm60, %v36, 0
  %64 = vmatprep.subr.bf16.mxu0 0
  %65 = vmatpush1.bf16.msra.mxu0 %v62
  %66 = vmatprep.subr.bf16.mxu0 0
  %67 = vmatpush1.bf16.msra.mxu0 0
  %68 = vmatprep.subr.bf16.mxu0 0
  %69 = vmatpush1.bf16.msra.mxu0 0
  %70 = vmatprep.subr.bf16.mxu0 0
  %71 = vmatpush1.bf16.msra.mxu0 0
  %72 = vmatprep.subr.bf16.mxu0 0
  %73 = vmatpush1.bf16.msra.mxu0 0
  %74 = vmatprep.subr.bf16.mxu0 0
  %75 = vmatpush1.bf16.msra.mxu0 0
  %76 = vmatprep.subr.bf16.mxu0 0
  %77 = vmatpush1.bf16.msra.mxu0 0
  %78 = vmatprep.subr.bf16.mxu0 0
  %79 = vmatpush1.bf16.msra.mxu0 0
  %80 = vmatprep.subr.bf16.mxu0 0
  %81 = vmatpush1.bf16.msra.mxu0 0
  %82 = vmatprep.subr.bf16.mxu0 0
  %83 = vmatpush1.bf16.msra.mxu0 0
  %84 = vmatprep.subr.bf16.mxu0 0
  %85 = vmatpush1.bf16.msra.mxu0 0
  %86 = vmatprep.subr.bf16.mxu0 0
  %87 = vmatpush1.bf16.msra.mxu0 0
  %88 = vmatprep.subr.bf16.mxu0 0
  %89 = vmatpush1.bf16.msra.mxu0 0
  %90 = vmatprep.subr.bf16.mxu0 0
  %91 = vmatpush1.bf16.msra.mxu0 0
  %92 = vmatprep.subr.bf16.mxu0 0
  %93 = vmatpush1.bf16.msra.mxu0 0
  %94 = vmatprep.subr.bf16.mxu0 0
  %95 = vmatpush1.bf16.msra.mxu0 0
  %96 = vmatprep.mubr.bf16.mxu0 0
  %97 = vmatmul.mubr.bf16.gmra.mrb[0].mxu0 %v46
  %v98 = vpop.f32.mrb[0].mxu0
  %v99 = vadd.f32 %v42, %v98
  %v100 = vpop.f32.mrb[0].mxu0
  %v101 = vpop.f32.mrb[0].mxu0
  %v102 = vadd.f32 %v42, %v101
  %v103 = vpop.f32.mrb[0].mxu0
  %104 = vmatprep.mubr.bf16.mxu0 0
  %105 = vmatmul.mubr.bf16.gmra.mrb[0].mxu0 %v49
  %v106 = vpop.f32.mrb[0].mxu0
  %v107 = vadd.f32 %v42, %v106
  %v108 = vpop.f32.mrb[0].mxu0
  %v109 = vpop.f32.mrb[0].mxu0
  %v110 = vadd.f32 %v42, %v109
  %v111 = vpop.f32.mrb[0].mxu0
  %112 = vmatprep.mubr.bf16.mxu0 0
  %113 = vmatmul.mubr.bf16.gmra.mrb[0].mxu0 %v52
  %v114 = vpop.f32.mrb[0].mxu0
  %v115 = vadd.f32 %v42, %v114
  %v116 = vpop.f32.mrb[0].mxu0
  %v117 = vpop.f32.mrb[0].mxu0
  %v118 = vadd.f32 %v42, %v117
  %v119 = vpop.f32.mrb[0].mxu0
  %120 = vmatprep.mubr.bf16.mxu0 0
  %121 = vmatmul.mubr.bf16.gmra.mrb[0].mxu0 %v55
  %v122 = vpop.f32.mrb[0].mxu0
  %v123 = vadd.f32 %v42, %v122
  %v124 = vpop.f32.mrb[0].mxu0
  %v125 = vpop.f32.mrb[0].mxu0
  %v126 = vadd.f32 %v42, %v125
  %v127 = vpop.f32.mrb[0].mxu0
  %128 = vmatprep.mubr.bf16.mxu0 0
  %129 = vmatmul.mubr.bf16.gmra.mrb[0].mxu0 %v58
  %v130 = vpop.f32.mrb[0].mxu0
  %v131 = vadd.f32 %v42, %v130
  %v132 = vpop.f32.mrb[0].mxu0
  %v133 = vpop.f32.mrb[0].mxu0
  %v134 = vadd.f32 %v42, %v133
  %v135 = vpop.f32.mrb[0].mxu0
  %136 = vdwg.mxu0
  %v137 = vld [vmem:[%s3] sm:$0x1]
  %v139 = vlaneseq
  %v140 = vshrl.u32 %v139, 7
  %v141 = vsub.s32 0, %v140
  %v142 = vrot.slane %v137, %v141
  %v144 = vmul.f32 %v99, %v142
  %v145 = vmul.f32 %v102, %v142
  %v146 = vmul.f32 %v107, %v142
  %v147 = vmul.f32 %v110, %v142
  %v148 = vmul.f32 %v115, %v142
  %v149 = vmul.f32 %v118, %v142
  %v150 = vmul.f32 %v123, %v142
  %v151 = vmul.f32 %v126, %v142
  %v152 = vmul.f32 %v131, %v142
  %v153 = vmul.f32 %v134, %v142
  %v154 = vld [vmem:[%s4] sm:$0x1]
  %v156 = vlaneseq
  %v157 = vshrl.u32 %v156, 7
  %v158 = vsub.s32 0, %v157
  %v159 = vrot.slane %v154, %v158
  %v161 = vadd.f32 %v144, %v159
  %v162 = vadd.f32 %v145, %v159
  %v163 = vadd.f32 %v146, %v159
  %v164 = vadd.f32 %v147, %v159
  %v165 = vadd.f32 %v148, %v159
  %v166 = vadd.f32 %v149, %v159
  %v167 = vadd.f32 %v150, %v159
  %v168 = vadd.f32 %v151, %v159
  %v169 = vadd.f32 %v152, %v159
  %v170 = vadd.f32 %v153, %v159
  %v171 = vmax.f32 %v161, 0.0
  %v172 = vmax.f32 %v162, 0.0
  %v173 = vmax.f32 %v163, 0.0
  %v174 = vmax.f32 %v164, 0.0
  %v175 = vmax.f32 %v165, 0.0
  %v176 = vmax.f32 %v166, 0.0
  %v177 = vmax.f32 %v167, 0.0
  %v178 = vmax.f32 %v168, 0.0
  %v179 = vmax.f32 %v169, 0.0
  %v180 = vmax.f32 %v170, 0.0
  %v181 = vpack.c.bf16 %v172, %v171
  %v182 = vpack.c.bf16 %v174, %v173
  %v183 = vpack.c.bf16 %v176, %v175
  %v184 = vpack.c.bf16 %v178, %v177
  %v185 = vpack.c.bf16 %v180, %v179
  %v191 = vunpack.c.l.b16 %v181
  %v192 = vunpack.c.h.b16 %v181
  %v193 = vunpack.c.l.b16 %v182
  %v194 = vunpack.c.h.b16 %v182
  %v195 = vunpack.c.l.b16 %v183
  %v196 = vunpack.c.h.b16 %v183
  %v197 = vunpack.c.l.b16 %v184
  %v198 = vunpack.c.h.b16 %v184
  %v199 = vunpack.c.l.b16 %v185
  %v200 = vunpack.c.h.b16 %v185
  %v201 = vpack.c.b16 %v191, %v191
  %v202 = vpack.c.b16 %v192, %v192
  %v203 = vpack.c.b16 %v193, %v193
  %v204 = vpack.c.b16 %v194, %v194
  %v205 = vpack.c.b16 %v195, %v195
  %v206 = vpack.c.b16 %v196, %v196
  %v207 = vpack.c.b16 %v197, %v197
  %v208 = vpack.c.b16 %v198, %v198
  %v209 = vpack.c.b16 %v199, %v199
  %v210 = vpack.c.b16 %v200, %v200
  %vm221 = vcmask 257024
  %222 = vst.msk [vmem:[%s5] sm:$0xf] %vm221, %v201
  %223 = vst.msk [vmem:[%s5 + $0x4] sm:$0xf] %vm221, %v202
  %224 = vst.msk [vmem:[%s5 + $0x8] sm:$0xf] %vm221, %v203
  %225 = vst.msk [vmem:[%s5 + $0xc] sm:$0xf] %vm221, %v204
  %226 = vst.msk [vmem:[%s5 + $0x10] sm:$0xf] %vm221, %v205
  %227 = vst.msk [vmem:[%s5 + $0x14] sm:$0xf] %vm221, %v206
  %228 = vst.msk [vmem:[%s5 + $0x18] sm:$0xf] %vm221, %v207
  %229 = vst.msk [vmem:[%s5 + $0x1c] sm:$0xf] %vm221, %v208
  %230 = vst.msk [vmem:[%s5 + $0x20] sm:$0xf] %vm221, %v209
  %231 = vst.msk [vmem:[%s5 + $0x24] sm:$0xf] %vm221, %v210
  // Predicated region
  $region22: #{tpu_custom_call.1} parent=0 // pred_check
    _
  $region23: #{tpu_custom_call.1} parent=0 // pred_check_branch
    %233 = sbr.rel (0) target = $region25
  $region24: #{tpu_custom_call.1} parent=0 // pred_region
    _
  $region25: #{tpu_custom_call.1} parent=0 // pred_fallthru
    _
  // Predicated region
  $region26: #{tpu_custom_call.1} parent=0 // pred_check
    _
  $region27: #{tpu_custom_call.1} parent=0 // pred_check_branch
    %235 = sbr.rel (0) target = $region29
  $region28: #{tpu_custom_call.1} parent=0 // pred_region
    _
  $region29: #{tpu_custom_call.1} parent=0 // pred_fallthru
    _

</llo_original>
